<compile_context>
chip_gen: v5e
topology: v5e:2x2
jax: 0.10.0
libtpu: 0.0.40
codegen_flags: <defaults>
</compile_context>

<pallas_src>
import jax
import jax.numpy as jnp
from jax.experimental import pallas as pl
from jax.experimental.pallas import tpu as pltpu


def _affine_kernel(ab_ref, x_ref, out_ref):
    """ab_ref: (2,) f32 in SMEM holding [A, B]; x/out: lane-dense VMEM tiles."""
    a = ab_ref[0]
    b = ab_ref[1]
    out_ref[...] = (a * x_ref[...].astype(jnp.float32) + b).astype(out_ref.dtype)


def _fold_policies(probabilities, probability_indices, weights):
    """Collapse the (K, L) policy tables to the two scalars of out = A*x + B."""
    K, L = probabilities.shape
    p = probabilities.astype(jnp.float32)
    pidx = probability_indices.astype(jnp.int32)
    w = weights.astype(jnp.float32)

    A = jnp.float32(0.0)
    B = jnp.float32(0.0)
    for k in range(K):
        # index_k = sum_i pidx[i] << i   (dynamic scalar)
        index = jnp.int32(0)
        for i in range(L):
            index = index + pidx[k, i] * jnp.int32(1 << i)

        # a_k = trans_prob of the chosen selection.
        a = jnp.float32(1.0)
        for i in range(L):
            a = a * jnp.where(pidx[k, i] != 0, p[k, i], jnp.float32(1.0) - p[k, i])

        # b_k = sum of trans_probs of all *other* selections (summed explicitly,
        # not computed as 1 - a, to match the reference's rounding).
        b = jnp.float32(0.0)
        for sel in range(2 ** L):
            tp = jnp.float32(1.0)
            for i in range(L):
                if sel & (1 << i):
                    tp = tp * p[k, i]
                else:
                    tp = tp * (jnp.float32(1.0) - p[k, i])
            b = b + jnp.where(jnp.int32(sel) == index, jnp.float32(0.0), tp)

        A = A + w[k] * a
        B = B + w[k] * b

    return A * jnp.float32(0.5), B * jnp.float32(0.5)


def mixed_augment(origin_data, probabilities, probability_indices, magnitudes,
                  weights=None, *, tile_bytes=4 * 1024 * 1024):
    """origin_data: (N, C, H, W); probabilities/magnitudes: (K, L) f32;
    probability_indices: (K, L) with 0/1 entries; weights: (K,)."""
    del magnitudes  # forward value does not depend on magnitudes (see header TODO)
    K, _ = probabilities.shape
    if weights is None:
        weights = jnp.ones((K,), dtype=jnp.float32)  # torch.tensor([1, 1]) default

    A, B = _fold_policies(probabilities, probability_indices, weights)
    ab = jnp.stack([A, B]).astype(jnp.float32)

    orig_shape = origin_data.shape
    dtype = origin_data.dtype
    total = origin_data.size

    # --- lane-dense 2D slab --------------------------------------------------
    # Largest TN in {1024,512,256,128} that divides `total` AND leaves >= 16
    # rows (so we get >= 2 row blocks of 8 for the parallel grid); if none,
    # relax the row requirement, then divisibility (tiny < TN tail pad only).
    TN = None
    for cand in (1024, 512, 256, 128):
        if total % cand == 0 and total >= 16 * cand:
            TN = cand
            break
    if TN is None:
        for cand in (1024, 512, 256, 128):
            if total % cand == 0:
                TN = cand
                break
    if TN is None:
        TN = 128

    rows = pl.cdiv(total, TN)
    padded_total = rows * TN
    flat = origin_data.reshape(-1)
    if padded_total != total:
        flat = jnp.pad(flat, (0, padded_total - total))  # tail pad of < TN elements
    x2d = flat.reshape(rows, TN)

    # --- row tiling ------------------------------------------------------------
    dsize = jnp.dtype(dtype).itemsize
    if rows <= 8:
        TM = rows  # single full-extent block (block dim == array dim is allowed)
    else:
        target_rows = max(8, (tile_bytes // (TN * dsize)) // 8 * 8)
        # Cap so the grid has >= 2 blocks whenever rows >= 16 (v7x: 2 TensorCores).
        half = max(8, (rows // 2) // 8 * 8) if rows >= 16 else 8
        TM = min(target_rows, half)
    grid = (pl.cdiv(rows, TM),)  # ragged last block is fine: op is elementwise

    out2d = pl.pallas_call(
        _affine_kernel,
        out_shape=jax.ShapeDtypeStruct((rows, TN), dtype),
        grid=grid,
        in_specs=[
            pl.BlockSpec(memory_space=pltpu.MemorySpace.SMEM),  # [A, B]
            pl.BlockSpec((TM, TN), lambda i: (i, 0)),           # x tile (VMEM)
        ],
        out_specs=pl.BlockSpec((TM, TN), lambda i: (i, 0)),
        compiler_params=pltpu.CompilerParams(
            dimension_semantics=("parallel",),
            vmem_limit_bytes=32 * 1024 * 1024),
    )(ab, x2d)

    out = out2d.reshape(-1)
    if padded_total != total:
        out = out[:total]
    return out.reshape(orig_shape)


def _reference(origin_data, probabilities, probability_indices, magnitudes, weights):
    """Pure-JAX replica of the PyTorch MixedAugment forward, for verification."""
    K, L = probabilities.shape
    acc = jnp.zeros_like(origin_data)
    for k in range(K):
        p = probabilities[k]
        pidx = probability_indices[k]
        m = magnitudes[k]
        w = weights[k]
        index = jnp.int32(0)
        for i in range(L):
            index = index + pidx[i].astype(jnp.int32) * (1 << i)
        com = jnp.zeros_like(origin_data)
        for selection in range(2 ** L):
            tp = jnp.float32(1.0)
            data = origin_data
            adds = jnp.float32(0.0)
            for i in range(L):
                if selection & (1 << i):
                    tp = tp * p[i]
                    data = data - m[i]
                    adds = adds + m[i]
                else:
                    tp = tp * (1.0 - p[i])
            data = data + adds  # data.detach() + adds  (forward value)
            com = com + jnp.where(selection == index, tp * data,
                                  jnp.broadcast_to(tp, origin_data.shape))
        acc = acc + w * com
    return acc / 2.0


if __name__ == "__main__":
    key = jax.random.PRNGKey(0)
    kx, kp, km, kidx, kx2 = jax.random.split(key, 5)

    # Small shapes consistent with the module.
    N, C, H, W = 2, 4, 16, 16
    K = 2  # number of sub-policies (MixedAugment)
    L = 2  # len(sub_policy) per DifferentiableAugment

    origin_data = jax.random.normal(kx, (N, C, H, W), dtype=jnp.float32)
    probabilities = jax.random.uniform(kp, (K, L), dtype=jnp.float32)
    probability_indices = jax.random.bernoulli(kidx, 0.5, (K, L)).astype(jnp.int32)
    magnitudes = jax.random.uniform(km, (K, L), dtype=jnp.float32)
    weights = jnp.ones((K,), dtype=jnp.float32)  # torch.tensor([1, 1])

    out = mixed_augment(origin_data, probabilities, probability_indices,
                        magnitudes, weights)
    out = jax.block_until_ready(out)

    ref = _reference(origin_data, probabilities, probability_indices,
                     magnitudes, weights)
    assert out.shape == origin_data.shape and out.dtype == origin_data.dtype
    assert jnp.allclose(out, ref, atol=1e-5, rtol=1e-5), \
        float(jnp.max(jnp.abs(out - ref)))

    # Second, ragged-row shape (rows not a multiple of TM) to exercise the
    # partial-block path with no pad/slice HBM passes.
    origin_data2 = jax.random.normal(kx2, (3, 7, 16, 16), dtype=jnp.float32)
    out2 = jax.block_until_ready(
        mixed_augment(origin_data2, probabilities, probability_indices,
                      magnitudes, weights))
    ref2 = _reference(origin_data2, probabilities, probability_indices,
                      magnitudes, weights)
    assert out2.shape == origin_data2.shape and out2.dtype == origin_data2.dtype
    assert jnp.allclose(out2, ref2, atol=1e-5, rtol=1e-5), \
        float(jnp.max(jnp.abs(out2 - ref2)))

    print("KERNEL_OK")
</pallas_src>

<mosaic_0001>
module attributes {stable_mosaic.version = 11 : i64} {
  func.func @_affine_kernel(%arg0: i32, %arg1: memref<2xf32, #tpu.memory_space<smem>>, %arg2: memref<8x128xf32, #tpu.memory_space<vmem>>, %arg3: memref<8x128xf32, #tpu.memory_space<vmem>>) attributes {dimension_semantics = [#tpu.dimension_semantics<parallel>], iteration_bounds = array<i64: 2>, scalar_prefetch = 0 : i64, scratch_operands = 0 : i64, tpu.core_type = #tpu.core_type<tc>, window_params = [{transform_indices = @transform_0, window_bounds = array<i64: 2>}, {transform_indices = @transform_1, window_bounds = array<i64: 8, 128>}, {transform_indices = @transform_2, window_bounds = array<i64: 8, 128>}]} {
    %c0 = arith.constant 0 : index
    %0 = memref.load %arg1[%c0] : memref<2xf32, #tpu.memory_space<smem>>
    %c1 = arith.constant 1 : index
    %1 = memref.load %arg1[%c1] : memref<2xf32, #tpu.memory_space<smem>>
    %c0_0 = arith.constant 0 : index
    %c0_1 = arith.constant 0 : index
    %2 = vector.load %arg2[%c0_0, %c0_1] : memref<8x128xf32, #tpu.memory_space<vmem>>, vector<8x128xf32>
    %3 = vector.broadcast %0 : f32 to vector<8x128xf32>
    %4 = arith.mulf %3, %2 : vector<8x128xf32>
    %5 = vector.broadcast %1 : f32 to vector<8x128xf32>
    %6 = arith.addf %4, %5 : vector<8x128xf32>
    %c0_2 = arith.constant 0 : index
    %c0_3 = arith.constant 0 : index
    %7 = vector.load %arg3[%c0_2, %c0_3] : memref<8x128xf32, #tpu.memory_space<vmem>>, vector<8x128xf32>
    tpu.vector_store %arg3[%c0_2, %c0_3], %6 {strides = array<i32>} : memref<8x128xf32, #tpu.memory_space<vmem>>, vector<8x128xf32>,
    return
  }
  func.func @transform_0(%arg0: i32) -> i32 {
    %c0_i32 = arith.constant 0 : i32
    %c0_i32_0 = arith.constant 0 : i32
    return %c0_i32 : i32
  }
  func.func @transform_1(%arg0: i32) -> (i32, i32) {
    %c0_i32 = arith.constant 0 : i32
    %c0_i32_0 = arith.constant 0 : i32
    return %arg0, %c0_i32 : i32, i32
  }
  func.func @transform_2(%arg0: i32) -> (i32, i32) {
    %c0_i32 = arith.constant 0 : i32
    %c0_i32_0 = arith.constant 0 : i32
    return %arg0, %c0_i32 : i32, i32
  }
}

</mosaic_0001>

<llo_original>
// kernel: tpu_custom_call.1
$region0: #{tpu_custom_call.1}
  #allocation0 [shape = 'u32[]', space=smem, size = 0x4, offset = 0x4, fixed_abs, tag = 'smem constant byte address 0x4 - core index']
  #allocation1 [shape = 'u32[72,128]{1,0:T(1,128)}', space=vmem, size = 0x9000, scoped, tag = 'internal scratch']
  %s0 = inlined_call_operand.hbm [shape: f32[2], index: 0, kind: input, shape index: {}]
  %s1 = inlined_call_operand.hbm [shape: f32[16,128], index: 1, kind: input, shape index: {}]
  %s2 = inlined_call_operand.hbm [shape: f32[16,128], index: 2, kind: output, shape index: {}]
  %s3 = sld [smem:[#allocation0]]
  $region49: #{tpu_custom_call.1} parent=0
    _
  %s5 = ssub.s32 1, %s3
  %s6 = scalar_select 0, %s5, %s3
  $region1: #{tpu_custom_call.1} parent=0
    #allocation2 [shape = 'u8[512]{0}', space=smem, size = 0x200, scoped, tag = 'input window, operand 0, single buffered']
    #allocation3 [shape = 's32[2]{0}', space=sflag, size = 0x8, scoped, tag = 'scoped memory for tpu_custom_call.1']
    #allocation4 [shape = 's32[2]{0}', space=sflag, size = 0x8, scoped, tag = 'scoped memory for tpu_custom_call.1']
    #allocation5 [shape = 's32[2]{0}', space=sflag, size = 0x8, scoped, tag = 'scoped memory for tpu_custom_call.1']
    #allocation6 [shape = 'u8[8192]{0}', space=vmem, size = 0x2000, scoped, tag = 'input window, operand 1']
    #allocation7 [shape = 'u8[8192]{0}', space=vmem, size = 0x2000, scoped, tag = 'output window, operand 0']
    %7 = vsyncpa [#allocation5], 0
    %8 = vsyncpa [#allocation3], 0
    %s9 = scalar_lea.sflag [#allocation3], 1
    %10 = vsyncpa %s9, 0
    %11 = vsyncpa [#allocation4], 0
    %s12 = scalar_lea.sflag [#allocation4], 1
    %13 = vsyncpa %s12, 0
    loop: start=0, step=1, limit=4
    $region2: #{tpu_custom_call.1} parent=1 // loop_pre_header
      _
    $region3: #{tpu_custom_call.1} parent=1 // loop_header
      %s15 = sphi 0, %s19
      %p16 = scmp.ge.s32.totalorder %s15, 4
      %s23 = sphi 0, %s23
      %s25 = sphi 0, %s23
      %s26 = sphi 0, %s25
      %s40 = sphi 0, %s26
      %s46 = sphi 0, %s48
      %s49 = sphi 0, %s46
      %s50 = sphi 0, %s49
      %s66 = sphi 0, %s50
      %s72 = sphi 0, %s74
      %s75 = sphi 0, %s72
      %s76 = sphi 0, %s75
      %s92 = sphi 0, %s76
    $region4: #{tpu_custom_call.1} parent=1 // loop_header_branch
      %18 = sbr.rel (%p16) target = $region8
    $region5: #{tpu_custom_call.1} parent=1 // loop_body
      %s20 = ssub.s32 %s15, 1
      %s21 = ssub.s32 %s15, 2
      %s22 = sadd.s32 %s15, 1
      %s24 = sadd.s32 %s23, 1
      %p27 = scmp.eq.s32.totalorder %s15, 1
      %p28 = scmp.ne.s32.totalorder %s23, %s25
      %p29 = scmp.eq.s32.totalorder %s15, 0
      %p30 = por %p28, %p29
      %p31 = scmp.ne.s32.totalorder %s23, %s25
      %p32 = scmp.eq.s32.totalorder %s20, 1
      %p33 = por %p31, %p32
      %p34 = scmp.ne.s32.totalorder %s25, %s26
      %p35 = scmp.eq.s32.totalorder %s20, 0
      %p36 = por %p34, %p35
      %p37 = scmp.ne.s32.totalorder %s25, %s26
      %p38 = scmp.eq.s32.totalorder %s21, 1
      %p39 = por %p37, %p38
      %p41 = scmp.ne.s32.totalorder %s26, %s40
      %p42 = scmp.eq.s32.totalorder %s21, 0
      %p43 = por %p41, %p42
      %s44 = ssub.s32 %s15, %s22
      %p45 = scmp.eq.s32.totalorder %s44, 0
      %s47 = sadd.s32 %s46, 1
      %s48 = scalar_select %p45, %s46, %s47
      %p51 = pneg %p45
      %p52 = scmp.eq.s32.totalorder %s15, 1
      %p53 = por %p51, %p52
      %p54 = scmp.ne.s32.totalorder %s46, %s49
      %p55 = scmp.eq.s32.totalorder %s15, 0
      %p56 = por %p54, %p55
      %p57 = scmp.ne.s32.totalorder %s46, %s49
      %p58 = scmp.eq.s32.totalorder %s20, 1
      %p59 = por %p57, %p58
      %p60 = scmp.ne.s32.totalorder %s49, %s50
      %p61 = scmp.eq.s32.totalorder %s20, 0
      %p62 = por %p60, %p61
      %p63 = scmp.ne.s32.totalorder %s49, %s50
      %p64 = scmp.eq.s32.totalorder %s21, 1
      %p65 = por %p63, %p64
      %p67 = scmp.ne.s32.totalorder %s50, %s66
      %p68 = scmp.eq.s32.totalorder %s21, 0
      %p69 = por %p67, %p68
      %s70 = ssub.s32 %s15, %s22
      %p71 = scmp.eq.s32.totalorder %s70, 0
      %s73 = sadd.s32 %s72, 1
      %s74 = scalar_select %p71, %s72, %s73
      %p77 = pneg %p71
      %p78 = scmp.eq.s32.totalorder %s15, 1
      %p79 = por %p77, %p78
      %p80 = scmp.ne.s32.totalorder %s72, %s75
      %p81 = scmp.eq.s32.totalorder %s15, 0
      %p82 = por %p80, %p81
      %p83 = scmp.ne.s32.totalorder %s72, %s75
      %p84 = scmp.eq.s32.totalorder %s20, 1
      %p85 = por %p83, %p84
      %p86 = scmp.ne.s32.totalorder %s75, %s76
      %p87 = scmp.eq.s32.totalorder %s20, 0
      %p88 = por %p86, %p87
      %p89 = scmp.ne.s32.totalorder %s75, %s76
      %p90 = scmp.eq.s32.totalorder %s21, 1
      %p91 = por %p89, %p90
      %p93 = scmp.ne.s32.totalorder %s76, %s92
      %p94 = scmp.eq.s32.totalorder %s21, 0
      %p95 = por %p93, %p94
      %p96 = scmp.le.s32.totalorder 1, %s15
      %p97 = scmp.lt.s32.totalorder %s15, 3
      %p98 = pnand %p96, %p97
      %p99 = pneg %p98
      // Predicated region
      $region9: #{tpu_custom_call.1} parent=5 // pred_check
        _
      $region10: #{tpu_custom_call.1} parent=5 // pred_check_branch
        %101 = sbr.rel (%p98) target = $region12
      $region11: #{tpu_custom_call.1} parent=5 // pred_region
        %s102 = ssub.s32 %s15, 1
        // Predicated region
        $region13: #{tpu_custom_call.1} parent=11 // pred_check
          %p103 = pneg %p36
        $region14: #{tpu_custom_call.1} parent=11 // pred_check_branch
          %105 = sbr.rel (%p103) target = $region16
        $region15: #{tpu_custom_call.1} parent=11 // pred_region
          %107 = vsyncadd [#allocation5], 0
          %s109 = sshll.u32 %s0, 4
          %s110 = int_to_ptr.hbm [resolvable:$true] %s109
          %112 = dma.hbm_to_smem %s110, 16, [#allocation2], [#allocation5]
        $region16: #{tpu_custom_call.1} parent=11 // pred_fallthru
          _
      $region12: #{tpu_custom_call.1} parent=5 // pred_fallthru
        _
      %p113 = scmp.lt.s32.totalorder %s15, 2
      // Predicated region
      $region17: #{tpu_custom_call.1} parent=5 // pred_check
        %p114 = pneg %p113
      $region18: #{tpu_custom_call.1} parent=5 // pred_check_branch
        %116 = sbr.rel (%p114) target = $region20
      $region19: #{tpu_custom_call.1} parent=5 // pred_region
        // Predicated region
        $region21: #{tpu_custom_call.1} parent=19 // pred_check
          %p117 = pneg %p56
        $region22: #{tpu_custom_call.1} parent=19 // pred_check_branch
          %119 = sbr.rel (%p117) target = $region24
        $region23: #{tpu_custom_call.1} parent=19 // pred_region
          %s120 = sand.u32 %s46, 1
          %s121 = scalar_lea.sflag [#allocation3], %s120
          %s122 = sand.u32 %s46, 1
          %s123 = smul.addr %s122, 8
          %s124 = scalar_lea.vmem [#allocation6], %s123
          %126 = vsyncadd %s121, 0
          %s127 = smul.addr %s15, 8
          %s128 = scalar_lea.hbm %s1, %s127
          %s130 = sshll.u32 %s128, 4
          %s131 = int_to_ptr.hbm [resolvable:$true] %s130
          %s132 = sshll.u32 %s124, 4
          %s133 = int_to_ptr.vmem [resolvable:$true] %s132
          %135 = dma.hbm_to_vmem [thread:$0]  %s131, 128, %s133, %s121
        $region24: #{tpu_custom_call.1} parent=19 // pred_fallthru
          _
      $region20: #{tpu_custom_call.1} parent=5 // pred_fallthru
        _
      %p136 = scmp.le.s32.totalorder 1, %s15
      %p137 = scmp.lt.s32.totalorder %s15, 3
      %p138 = pnand %p136, %p137
      %p139 = pneg %p138
      // Predicated region
      $region25: #{tpu_custom_call.1} parent=5 // pred_check
        _
      $region26: #{tpu_custom_call.1} parent=5 // pred_check_branch
        %141 = sbr.rel (%p138) target = $region28
      $region27: #{tpu_custom_call.1} parent=5 // pred_region
        %s142 = ssub.s32 %s15, 1
        // Predicated region
        $region29: #{tpu_custom_call.1} parent=27 // pred_check
          %p143 = pneg %p36
        $region30: #{tpu_custom_call.1} parent=27 // pred_check_branch
          %145 = sbr.rel (%p143) target = $region32
        $region31: #{tpu_custom_call.1} parent=27 // pred_region
          %147 = dma.done [#allocation5], 16
        $region32: #{tpu_custom_call.1} parent=27 // pred_fallthru
          _
        %s148 = sand.u32 %s49, 1
        %s149 = scalar_lea.sflag [#allocation3], %s148
        %s150 = sand.u32 %s49, 1
        %s151 = smul.addr %s150, 8
        %s152 = scalar_lea.vmem [#allocation6], %s151
        // Predicated region
        $region33: #{tpu_custom_call.1} parent=27 // pred_check
          %p153 = pneg %p62
        $region34: #{tpu_custom_call.1} parent=27 // pred_check_branch
          %155 = sbr.rel (%p153) target = $region36
        $region35: #{tpu_custom_call.1} parent=27 // pred_region
          %157 = dma.done %s149, 128
        $region36: #{tpu_custom_call.1} parent=27 // pred_fallthru
          _
        %158 = sfence
        %p159 = pneg %p36
        %p160 = pneg %p33
        %s161 = sand.u32 %s49, 1
        %s162 = scalar_lea.sflag [#allocation3], %s161
        %s163 = sand.u32 %s49, 1
        %s164 = smul.addr %s163, 8
        %s165 = scalar_lea.vmem [#allocation6], %s164
        %p166 = pneg %p62
        %p167 = pneg %p59
        %p168 = pneg %p88
        %p169 = pneg %p85
        %s170 = sand.u32 %s75, 1
        %s171 = scalar_lea.sflag [#allocation4], %s170
        %s172 = sand.u32 %s75, 1
        %s173 = smul.addr %s172, 8
        %s174 = scalar_lea.vmem [#allocation7], %s173
        %s175 = sld [smem:[#allocation2]]
        %s176 = sld [smem:[#allocation2 + $0x1]]
        %v177 = vld [vmem:[%s152] sm:$0xff]
        %v178 = vstv %s175
        %v179 = vmul.f32 %v178, %v177
        %v180 = vstv %s176
        %v181 = vadd.f32 %v179, %v180
        %182 = vst [vmem:[%s174] sm:$0xff] %v181
        %s183 = sand.u32 %s75, 1
        %s184 = scalar_lea.sflag [#allocation4], %s183
        %s185 = sand.u32 %s75, 1
        %s186 = smul.addr %s185, 8
        %s187 = scalar_lea.vmem [#allocation7], %s186
        // Predicated region
        $region37: #{tpu_custom_call.1} parent=27 // pred_check
          %p188 = pneg %p85
        $region38: #{tpu_custom_call.1} parent=27 // pred_check_branch
          %190 = sbr.rel (%p188) target = $region40
        $region39: #{tpu_custom_call.1} parent=27 // pred_region
          %192 = vsyncadd %s184, 0
          %s193 = smul.addr %s20, 8
          %s194 = scalar_lea.hbm %s2, %s193
          %s196 = sshll.u32 %s187, 4
          %s197 = int_to_ptr.vmem [resolvable:$true] %s196
          %s198 = sshll.u32 %s194, 4
          %s199 = int_to_ptr.hbm [resolvable:$true] %s198
          %201 = dma.vmem_to_hbm [thread:$0]  %s197, 128, %s199, %s184
        $region40: #{tpu_custom_call.1} parent=27 // pred_fallthru
          _
      $region28: #{tpu_custom_call.1} parent=5 // pred_fallthru
        _
      %p202 = scmp.le.s32.totalorder 2, %s15
      // Predicated region
      $region41: #{tpu_custom_call.1} parent=5 // pred_check
        %p203 = pneg %p202
      $region42: #{tpu_custom_call.1} parent=5 // pred_check_branch
        %205 = sbr.rel (%p203) target = $region44
      $region43: #{tpu_custom_call.1} parent=5 // pred_region
        %s206 = ssub.s32 %s15, 2
        // Predicated region
        $region45: #{tpu_custom_call.1} parent=43 // pred_check
          %p207 = pneg %p91
        $region46: #{tpu_custom_call.1} parent=43 // pred_check_branch
          %209 = sbr.rel (%p207) target = $region48
        $region47: #{tpu_custom_call.1} parent=43 // pred_region
          %s210 = sand.u32 %s76, 1
          %s211 = scalar_lea.sflag [#allocation4], %s210
          %s212 = sand.u32 %s76, 1
          %s213 = smul.addr %s212, 8
          %s214 = scalar_lea.vmem [#allocation7], %s213
          %216 = dma.done %s211, 128
        $region48: #{tpu_custom_call.1} parent=43 // pred_fallthru
          _
      $region44: #{tpu_custom_call.1} parent=5 // pred_fallthru
        _
    $region6: #{tpu_custom_call.1} parent=1 // loop_footer
      %s19 = sadd.s32 1, %s15
    $region7: #{tpu_custom_call.1} parent=1 // loop_footer_branch
      %14 = sbr.rel target = $region3
    $region8: #{tpu_custom_call.1} parent=1 // loop_exit
      _
    %217 = vsyncpa [#allocation3], 1
    %s218 = scalar_lea.sflag [#allocation3], 1
    %219 = vsyncpa %s218, 1
    %220 = vsyncpa [#allocation4], 1
    %s221 = scalar_lea.sflag [#allocation4], 1
    %222 = vsyncpa %s221, 1
    %223 = vsyncpa [#allocation5], 1
    %s224 = scalar_lea.sflag [#allocation5], 1
    %225 = vsyncpa %s224, 1

</llo_original>
